<compile_context>
chip_gen: v7x
topology: tpu7x:2x2x1
jax: 0.10.0
libtpu: 0.0.40
codegen_flags: <defaults>
</compile_context>

<pallas_src>
import functools
import math

import jax
import jax.numpy as jnp
from jax.experimental import pallas as pl
from jax.experimental.pallas import tpu as pltpu


def make_positional_encoding_table(d_model: int, max_len: int = 100) -> jnp.ndarray:
    """Same buffer as the PyTorch __init__: shape (max_len, 1, d_model), float32."""
    position = jnp.arange(0, max_len, dtype=jnp.float32)[:, None]            # (max_len, 1)
    div_term = jnp.exp(
        jnp.arange(0, d_model, 2, dtype=jnp.float32) * (-math.log(10000.0) / d_model)
    )                                                                         # (d_model/2,)
    angles = position * div_term                                              # (max_len, d_model/2)
    pe = jnp.zeros((max_len, d_model), dtype=jnp.float32)
    pe = pe.at[:, 0::2].set(jnp.sin(angles))
    pe = pe.at[:, 1::2].set(jnp.cos(angles))
    return pe[:, None, :]                                                     # (max_len, 1, d_model)


def _round_up(n: int, m: int) -> int:
    return ((n + m - 1) // m) * m


def _pe_kernel(seed_ref, x_ref, pe_ref, o_ref, *,
               p: float, training: bool, batch: int, d_model: int, tile_rows: int):
    """x_ref/o_ref: (ts, B*D) slab.  pe_ref: resident (S_pad, D) table."""
    if training and p >= 1.0:
        # torch dropout with p == 1.0 zeroes everything (avoid 1/(1-p) = inf).
        o_ref[...] = jnp.zeros(o_ref.shape, o_ref.dtype)
        return

    i = pl.program_id(0)
    rows, lanes = x_ref.shape                      # static block shape
    row0 = pl.multiple_of(i * tile_rows, tile_rows)

    # pe is resident in VMEM for the whole grid; slice this tile's rows.
    pe_blk = pe_ref[pl.ds(row0, rows), :]          # (ts, D)

    if batch == 1:
        y = x_ref[...] + pe_blk
    elif d_model % 128 == 0:
        # Lane-aligned: reshape/broadcast view, no materialized pe tile.
        y = (x_ref[...].reshape(rows, batch, d_model)
             + pe_blk[:, None, :]).reshape(rows, lanes)
    else:
        # Small/unaligned D (demo path): lane concatenation of the tiny pe tile.
        y = x_ref[...] + jnp.tile(pe_blk, (1, batch))

    if training and p > 0.0:
        # Inverted dropout with a tiling-independent counter hash (murmur3-style
        # finalizer of the global element id mixed with the seed).  Pure VPU
        # integer ops -> lowers on Mosaic and in interpret mode.
        seed = seed_ref[0].astype(jnp.uint32)
        r = jax.lax.broadcasted_iota(jnp.uint32, (rows, lanes), 0)
        c = jax.lax.broadcasted_iota(jnp.uint32, (rows, lanes), 1)
        gid = (r + (i * tile_rows).astype(jnp.uint32)) * jnp.uint32(lanes) + c
        h = gid * jnp.uint32(0x9E3779B1) + seed
        h = h ^ (h >> 16)
        h = h * jnp.uint32(0x85EBCA6B)
        h = h ^ (h >> 13)
        h = h * jnp.uint32(0xC2B2AE35)
        h = h ^ (h >> 16)
        threshold = jnp.uint32(min(int(round(p * (2 ** 32))), 2 ** 32 - 1))
        keep = h >= threshold                      # P(keep) = 1 - p
        scale = jnp.asarray(1.0 / (1.0 - p), dtype=y.dtype)
        y = jnp.where(keep, y * scale, jnp.zeros_like(y))

    o_ref[...] = y.astype(o_ref.dtype)


def _vmem_budget_bytes() -> tuple[int, int]:
    """(working-set budget, physical VMEM capacity), generation-aware."""
    try:
        cap = int(pltpu.get_tpu_info().vmem_capacity_bytes)
    except Exception:
        cap = 64 * 1024 * 1024                     # conservative (v7x per-TC)
    # ~24 MiB working set on v7x (64 MiB VMEM), ~32 MiB on v5e/v6e (128 MiB).
    budget = min(32 * 1024 * 1024, max(cap // 2 - 8 * 1024 * 1024, 4 * 1024 * 1024))
    return budget, cap


def positional_encoding_forward(x, pe, *, p: float = 0.1, training: bool = False,
                                seed: int = 0, tile_rows=None):
    """x: (S, B, D). Returns dropout(x + pe[:S]) with the same shape/dtype."""
    S, B, D = x.shape
    dtype = x.dtype
    itemsize = jnp.dtype(dtype).itemsize
    BD = B * D

    x2d = x.reshape(S, BD)                         # lane-dense slab (dense for B*D % 128 == 0)
    pe2d = pe[:S, 0, :].astype(dtype)              # (S, D); broadcast over B in-kernel

    # Sublane packing multiple for the dtype (f32: 8, bf16: 16, int8/fp8: 32).
    sub = {1: 32, 2: 16}.get(itemsize, 8)

    budget, vmem_cap = _vmem_budget_bytes()
    row_bytes = BD * itemsize
    # Per-row working set: double-buffered x in + out blocks plus in-kernel
    # temporaries (f32/u32 compute temps; ~3 extra x-rows when dropout is on).
    extra_rows = 3 if (training and 0.0 < p < 1.0) else 1
    per_row = 4 * row_bytes + extra_rows * BD * 4
    pe_resident = 2 * _round_up(S, sub) * D * itemsize

    if tile_rows is not None:
        ts = max(sub, _round_up(int(tile_rows), sub))
    else:
        avail = max(budget - pe_resident, per_row * sub)
        ts = max(sub, (avail // per_row) // sub * sub)
        # TODO(synk): for extreme B*D (row working set >> VMEM) a second grid
        # axis over lanes would be needed; not implemented (unrealistic here).
        # v7x megacore: make sure there are >= 2 row tiles when S allows.
        if ts >= S and S > sub:
            ts = _round_up(-(-S // 2), sub)
    ts = min(ts, _round_up(S, sub))

    n_tiles = pl.cdiv(S, ts)
    grid = (n_tiles,)

    # pe is loaded once as a resident full block; pad it so the in-kernel
    # pl.ds(i*ts, ts) slice never runs past its allocation on the last tile.
    S_pad = n_tiles * ts
    if S_pad > S:
        pe2d = jnp.concatenate(
            [pe2d, jnp.zeros((S_pad - S, D), dtype=dtype)], axis=0)

    # vmem_limit from actual tile usage (+50% headroom), capped below physical.
    usage = 4 * ts * row_bytes + extra_rows * ts * BD * 4 + 2 * S_pad * D * itemsize
    vmem_limit = int(min(max(usage * 3 // 2 + (4 << 20), 16 << 20),
                         max(vmem_cap - (4 << 20), 16 << 20)))

    cost = pl.CostEstimate(
        flops=2 * S * BD,
        transcendentals=0,
        bytes_accessed=2 * S * BD * itemsize + S_pad * D * itemsize)

    kernel = functools.partial(_pe_kernel, p=float(p), training=bool(training),
                               batch=B, d_model=D, tile_rows=ts)
    out2d = pl.pallas_call(
        kernel,
        out_shape=jax.ShapeDtypeStruct((S, BD), dtype),
        grid_spec=pltpu.PrefetchScalarGridSpec(
            num_scalar_prefetch=1,                 # dropout seed lands in SMEM
            grid=grid,
            in_specs=[
                pl.BlockSpec((ts, BD), lambda i, seed: (i, 0)),
                pl.BlockSpec((S_pad, D), lambda i, seed: (0, 0)),   # resident pe
            ],
            out_specs=pl.BlockSpec((ts, BD), lambda i, seed: (i, 0)),
        ),
        compiler_params=pltpu.CompilerParams(
            dimension_semantics=("parallel",),     # S-tiles are independent
            vmem_limit_bytes=vmem_limit,
        ),
        cost_estimate=cost,
    )(jnp.array([seed], dtype=jnp.int32), x2d, pe2d)
    return out2d.reshape(S, B, D)


if __name__ == "__main__":
    d_model = 32
    batch = 2
    max_len = 100

    pe = make_positional_encoding_table(d_model, max_len)

    # --- eval mode (dropout is identity at inference) ---
    seq_len = 8
    x = jax.random.normal(jax.random.PRNGKey(0), (seq_len, batch, d_model), dtype=jnp.float32)
    out = jax.block_until_ready(positional_encoding_forward(x, pe, p=0.1, training=False))
    ref = x + pe[:seq_len, :, :]
    assert out.shape == x.shape and out.dtype == x.dtype
    assert jnp.allclose(out, ref, atol=1e-6, rtol=1e-6)

    # --- eval mode, multi-tile grid (pipelining + partial last block + padded pe) ---
    seq_len2 = 20
    x2 = jax.random.normal(jax.random.PRNGKey(1), (seq_len2, batch, d_model), dtype=jnp.float32)
    out2 = jax.block_until_ready(
        positional_encoding_forward(x2, pe, p=0.1, training=False, tile_rows=8))
    ref2 = x2 + pe[:seq_len2, :, :]
    assert jnp.allclose(out2, ref2, atol=1e-6, rtol=1e-6)

    # --- training mode: every element is either dropped (0) or scaled by 1/(1-p) ---
    p = 0.5
    out_tr = jax.block_until_ready(
        positional_encoding_forward(x, pe, p=p, training=True, seed=123))
    scaled = ref / (1.0 - p)
    ok = jnp.isclose(out_tr, 0.0, atol=1e-6) | jnp.isclose(out_tr, scaled, atol=1e-5, rtol=1e-5)
    assert bool(jnp.all(ok))
    dropped_frac = float(jnp.mean(jnp.isclose(out_tr, 0.0, atol=1e-6).astype(jnp.float32)))
    assert 0.2 < dropped_frac < 0.8, dropped_frac

    print("KERNEL_OK")
</pallas_src>

<mosaic_0001>
module attributes {stable_mosaic.version = 11 : i64} {
  func.func @_pe_kernel(%arg0: i32, %arg1: memref<1xi32, #tpu.memory_space<smem>>, %arg2: memref<8x64xf32, #tpu.memory_space<vmem>>, %arg3: memref<8x32xf32, #tpu.memory_space<vmem>>, %arg4: memref<8x64xf32, #tpu.memory_space<vmem>>) attributes {dimension_semantics = [#tpu.dimension_semantics<parallel>], iteration_bounds = array<i64: 1>, scalar_prefetch = 1 : i64, scratch_operands = 0 : i64, tpu.core_type = #tpu.core_type<tc>, window_params = [{transform_indices = @transform_0, window_bounds = array<i64: 8, 64>}, {pipeline_mode = #tpu.pipeline_mode<synchronous>, transform_indices = @transform_1, window_bounds = array<i64: 8, 32>}, {transform_indices = @transform_2, window_bounds = array<i64: 8, 64>}]} {
    %c8_i32 = arith.constant 8 : i32
    %0 = arith.muli %arg0, %c8_i32 : i32
    %1 = tpu.assume_multiple %0, 8 : i32
    %2 = arith.index_cast %1 : i32 to index
    %c0 = arith.constant 0 : index
    %3 = vector.load %arg3[%2, %c0] : memref<8x32xf32, #tpu.memory_space<vmem>>, vector<8x32xf32>
    %c0_0 = arith.constant 0 : index
    %c0_1 = arith.constant 0 : index
    %4 = vector.load %arg2[%c0_0, %c0_1] : memref<8x64xf32, #tpu.memory_space<vmem>>, vector<8x64xf32>
    %5 = tpu.concatenate %3, %3 in 1 : vector<8x32xf32>, vector<8x32xf32> -> vector<8x64xf32>
    %6 = arith.addf %4, %5 : vector<8x64xf32>
    %c0_2 = arith.constant 0 : index
    %c0_3 = arith.constant 0 : index
    %7 = vector.load %arg4[%c0_2, %c0_3] : memref<8x64xf32, #tpu.memory_space<vmem>>, vector<8x64xf32>
    tpu.vector_store %arg4[%c0_2, %c0_3], %6 {strides = array<i32>} : memref<8x64xf32, #tpu.memory_space<vmem>>, vector<8x64xf32>,
    return
  }
  func.func @transform_0(%arg0: i32, %arg1: memref<1xi32, #tpu.memory_space<smem>>) -> (i32, i32) {
    %c0_i32 = arith.constant 0 : i32
    %c0_i32_0 = arith.constant 0 : i32
    return %arg0, %c0_i32 : i32, i32
  }
  func.func @transform_1(%arg0: i32, %arg1: memref<1xi32, #tpu.memory_space<smem>>) -> (i32, i32) {
    %c0_i32 = arith.constant 0 : i32
    %c0_i32_0 = arith.constant 0 : i32
    %c0_i32_1 = arith.constant 0 : i32
    return %c0_i32, %c0_i32_0 : i32, i32
  }
  func.func @transform_2(%arg0: i32, %arg1: memref<1xi32, #tpu.memory_space<smem>>) -> (i32, i32) {
    %c0_i32 = arith.constant 0 : i32
    %c0_i32_0 = arith.constant 0 : i32
    return %arg0, %c0_i32 : i32, i32
  }
}

</mosaic_0001>

<llo_original>
// kernel: tpu_custom_call.1
$region0: #{tpu_custom_call.1}
  #allocation0 [shape = 'u32[]', space=smem, size = 0x4, offset = 0x4, fixed_abs, tag = 'smem constant byte address 0x4 - core index']
  #allocation1 [shape = 'u32[144,128]{1,0:T(1,128)}', space=vmem, size = 0x12000, scoped, tag = 'internal scratch']
  #allocation2 [shape = 's32[1]{0}', space=sflag, size = 0x4, scoped, tag = 'scoped memory for tpu_custom_call.1']
  #allocation3 [shape = 's32[1]{0:T(128)S(6)}', space=smem, size = 0x200, scoped, tag = 'prefetched SMEM operand 0']
  %s0 = inlined_call_operand.<no memory space> [shape: s32[1], index: 0, kind: input, shape index: {}]
  %s1 = inlined_call_operand.hbm [shape: f32[8,64], index: 1, kind: input, shape index: {}]
  %s2 = inlined_call_operand.hbm [shape: f32[8,32], index: 2, kind: input, shape index: {}]
  %s3 = inlined_call_operand.hbm [shape: f32[8,64], index: 3, kind: output, shape index: {}]
  %s4 = sld [smem:[#allocation0]]
  $region26: #{tpu_custom_call.1} parent=0
    _
  %s6 = ssub.s32 1, %s4
  %s7 = scalar_select 0, %s6, %s4
  %8 = sst [smem:[#allocation3]] %s0
  $region1: #{tpu_custom_call.1} parent=0
    #allocation4 [shape = 'u8[4096]{0}', space=vmem, size = 0x1000, scoped, tag = 'input window, operand 1, single buffered']
    #allocation5 [shape = 's32[1]{0}', space=sflag, size = 0x4, scoped, tag = 'scoped memory for tpu_custom_call.1']
    #allocation6 [shape = 's32[1]{0}', space=sflag, size = 0x4, scoped, tag = 'scoped memory for tpu_custom_call.1']
    #allocation7 [shape = 'u8[4096]{0}', space=vmem, size = 0x1000, scoped, tag = 'input window, operand 2, single buffered']
    #allocation8 [shape = 's32[1]{0}', space=sflag, size = 0x4, scoped, tag = 'scoped memory for tpu_custom_call.1']
    #allocation9 [shape = 'u8[4096]{0}', space=vmem, size = 0x1000, scoped, tag = 'output window, operand 0, single buffered']
    %9 = vsyncpa [#allocation5], 0
    %10 = vsyncpa [#allocation8], 0
    %11 = vsyncpa [#allocation6], 0
    // Predicated region
    $region2: #{tpu_custom_call.1} parent=1 // pred_check
      _
    $region3: #{tpu_custom_call.1} parent=1 // pred_check_branch
      %13 = sbr.rel (0) target = $region5
    $region4: #{tpu_custom_call.1} parent=1 // pred_region
      %s15 = ssub.s32 128, 128
      %16 = vsyncadd [#allocation5], %s15
      %s18 = sshll.u32 [#allocation4], 4
      %s19 = int_to_ptr.vmem [resolvable:$true] %s18
      %21 = dma.hbm_to_vmem [thread:$0]  %s1, 128, %s19, [#allocation5]
    $region5: #{tpu_custom_call.1} parent=1 // pred_fallthru
      _
    // Predicated region
    $region6: #{tpu_custom_call.1} parent=1 // pred_check
      _
    $region7: #{tpu_custom_call.1} parent=1 // pred_check_branch
      %23 = sbr.rel (0) target = $region9
    $region8: #{tpu_custom_call.1} parent=1 // pred_region
      %s25 = ssub.s32 128, 128
      %26 = vsyncadd [#allocation8], %s25
      %s28 = sshll.u32 [#allocation7], 4
      %s29 = int_to_ptr.vmem [resolvable:$true] %s28
      %31 = dma.hbm_to_vmem [thread:$0]  %s2, 128, %s29, [#allocation8]
    $region9: #{tpu_custom_call.1} parent=1 // pred_fallthru
      _
    // Predicated region
    $region10: #{tpu_custom_call.1} parent=1 // pred_check
      _
    $region11: #{tpu_custom_call.1} parent=1 // pred_check_branch
      %33 = sbr.rel (0) target = $region13
    $region12: #{tpu_custom_call.1} parent=1 // pred_region
      %34 = dma.done [#allocation5], 128
    $region13: #{tpu_custom_call.1} parent=1 // pred_fallthru
      _
    // Predicated region
    $region14: #{tpu_custom_call.1} parent=1 // pred_check
      _
    $region15: #{tpu_custom_call.1} parent=1 // pred_check_branch
      %36 = sbr.rel (0) target = $region17
    $region16: #{tpu_custom_call.1} parent=1 // pred_region
      %37 = dma.done [#allocation8], 128
    $region17: #{tpu_custom_call.1} parent=1 // pred_fallthru
      _
    %s38 = smul.u32 0, 8
    %s39 = scalar_lea.vmem [#allocation7], %s38
    %v40 = vld [vmem:[%s39] sm:$0xff]
    %v41 = vld [vmem:[#allocation4] sm:$0xff]
    %43 = vrot.lane.b32.xlu0 %v40, 32
    %v44 = vpop.permute.xlu0 %43
    %vm46 = vcmask 261120
    %v47 = vsel %vm46, %v40, %v44
    %v48 = vadd.f32 %v41, %v47
    %vm49 = vcmask 523264
    %50 = vst.msk [vmem:[#allocation9] sm:$0xff] %vm49, %v48
    // Predicated region
    $region18: #{tpu_custom_call.1} parent=1 // pred_check
      _
    $region19: #{tpu_custom_call.1} parent=1 // pred_check_branch
      %52 = sbr.rel (0) target = $region21
    $region20: #{tpu_custom_call.1} parent=1 // pred_region
      %s54 = ssub.s32 128, 128
      %55 = vsyncadd [#allocation6], %s54
      %s57 = sshll.u32 [#allocation9], 4
      %s58 = int_to_ptr.vmem [resolvable:$true] %s57
      %60 = dma.vmem_to_hbm [thread:$0]  %s58, 128, %s3, [#allocation6]
    $region21: #{tpu_custom_call.1} parent=1 // pred_fallthru
      _
    // Predicated region
    $region22: #{tpu_custom_call.1} parent=1 // pred_check
      _
    $region23: #{tpu_custom_call.1} parent=1 // pred_check_branch
      %62 = sbr.rel (0) target = $region25
    $region24: #{tpu_custom_call.1} parent=1 // pred_region
      %63 = dma.done [#allocation6], 128
    $region25: #{tpu_custom_call.1} parent=1 // pred_fallthru
      _
    %64 = vsyncpa [#allocation5], 1
    %65 = vsyncpa [#allocation8], 1
    %66 = vsyncpa [#allocation6], 1

</llo_original>
